<compile_context>
chip_gen: v6e
topology: v6e:2x2x1
jax: 0.10.0
libtpu: 0.0.40
codegen_flags: <defaults>
</compile_context>

<pallas_src>
import functools

import jax
import jax.numpy as jnp
from jax.experimental import pallas as pl
from jax.experimental.pallas import tpu as pltpu


def _layernorm_kernel(alpha_ref, bias_ref, x_ref, o_ref, *, eps):
    # alpha_ref / bias_ref are SMEM scalar-prefetch refs of shape (1,).
    x = x_ref[...]                                           # (BLOCK_ROWS, H)
    xf = x.astype(jnp.float32)
    n = x.shape[-1]

    # Pass 1: mean (lane reduction on the XLU).
    mean = jnp.sum(xf, axis=-1, keepdims=True) * jnp.float32(1.0 / n)

    # Pass 2 (tile already resident in VMEM -> free): centered, unbiased
    # variance.  jnp.float32(n - 1) == 0 for n == 1 gives 0/0 = NaN, matching
    # torch.std's default behaviour on a single element.
    diff = xf - mean
    var = jnp.sum(diff * diff, axis=-1, keepdims=True) / jnp.float32(n - 1)
    std = jnp.sqrt(var)

    # Exact divide on a (BLOCK_ROWS, 1) column: negligible cost, bit-faithful.
    scale = alpha_ref[0] / (std + jnp.float32(eps))
    o_ref[...] = (diff * scale + bias_ref[0]).astype(o_ref.dtype)


def _vmem_capacity_bytes():
    try:
        return int(pltpu.get_tpu_info().vmem_capacity_bytes)
    except Exception:
        # Conservative fallback (v7x: 64 MiB/TC; v5e/v6e: 128 MiB).  Undersizing
        # is harmless given the 4 MiB per-tile cap below.
        return 64 * 1024 * 1024


def _pick_block_rows(rows, hidden, dtype):
    """Row tile sized for pipeline steady-state, not VMEM capacity."""
    itemsize = jnp.dtype(dtype).itemsize
    sub = 16 if itemsize == 2 else 8                         # sublane packing
    vmem = _vmem_capacity_bytes()

    # Per-step INPUT tile budget: ~4 MiB (and never more than vmem/16), which
    # already saturates the HBM roofline; larger tiles only add VMEM pressure.
    tile_budget = min(vmem // 16, 4 << 20)
    br = max(sub, tile_budget // max(hidden * itemsize, 1))

    # Keep >= 8 grid steps when the problem is big enough: v7x shards the
    # parallel grid axis across 2 TensorCores, and each core needs >= ~4 steps
    # for double-buffered DMA to reach steady state.
    min_steps = 8
    if rows >= min_steps * sub:
        br = min(br, (rows + min_steps - 1) // min_steps)

    br = max(sub, (br // sub) * sub)                         # multiple of sublane pack
    br = min(br, ((rows + sub - 1) // sub) * sub)            # don't exceed row count
    return int(br)


def layer_norm_pallas(x, alpha, bias, eps=1e-6, block_rows=None):
    """x: (..., H).  alpha, bias: shape (1,) float32 parameters."""
    orig_shape = x.shape
    hidden = orig_shape[-1]
    x2d = x.reshape(-1, hidden)                              # (R, H)
    rows = x2d.shape[0]
    itemsize = jnp.dtype(x.dtype).itemsize

    if block_rows is None:
        block_rows = _pick_block_rows(rows, hidden, x.dtype)

    # Ragged last block is handled by Pallas: out-of-range rows are computed on
    # whatever is in the VMEM pad region (row-local, cannot fault) and their
    # writeback is clipped to out_shape.  No jnp.pad / slice HBM copies.
    grid_rows = pl.cdiv(rows, block_rows)

    # Scoped-VMEM budget: in + out double-buffered, plus the f32 tile-sized
    # intermediates the kernel materializes (xf, diff, result), plus margin for
    # Mosaic internal scratch.  Capped below physical capacity.
    tile_in_bytes = block_rows * hidden * itemsize
    pipeline_bytes = 2 * 2 * tile_in_bytes                   # (in + out) x 2 buffers
    f32_intermediate_bytes = 3 * block_rows * hidden * 4
    vmem_limit = pipeline_bytes + f32_intermediate_bytes + (8 << 20)
    vmem_limit = int(min(max(vmem_limit, 32 << 20),
                         int(_vmem_capacity_bytes() * 0.9)))

    cost = pl.CostEstimate(
        flops=7 * rows * hidden,
        transcendentals=rows,                                # sqrt per row
        bytes_accessed=2 * rows * hidden * itemsize,
    )

    # TODO(synk): for H < 128 (e.g. the demo's H=32) output stores lower to
    # masked vst.msk; real transformer hidden sizes (multiples of 128) are
    # lane-dense and unaffected.
    out = pl.pallas_call(
        functools.partial(_layernorm_kernel, eps=eps),
        out_shape=jax.ShapeDtypeStruct((rows, hidden), x.dtype),
        grid_spec=pltpu.PrefetchScalarGridSpec(
            num_scalar_prefetch=2,                           # alpha, bias -> SMEM
            grid=(grid_rows,),
            in_specs=[
                pl.BlockSpec((block_rows, hidden), lambda i, a, b: (i, 0)),
            ],
            out_specs=pl.BlockSpec((block_rows, hidden), lambda i, a, b: (i, 0)),
        ),
        compiler_params=pltpu.CompilerParams(
            dimension_semantics=("parallel",),
            vmem_limit_bytes=vmem_limit,
        ),
        cost_estimate=cost,
    )(alpha, bias, x2d)

    return out.reshape(orig_shape)


def _reference(x, alpha, bias, eps):
    mean = jnp.mean(x, axis=-1, keepdims=True)
    std = jnp.std(x, axis=-1, keepdims=True, ddof=1)         # unbiased, like torch.std
    return alpha[0] * (x - mean) / (std + eps) + bias[0]


if __name__ == "__main__":
    eps = 1e-6

    # Parameters matching nn.Parameter(torch.ones(1)) / torch.zeros(1).
    alpha = jnp.ones((1,), dtype=jnp.float32)
    bias = jnp.zeros((1,), dtype=jnp.float32)

    # Test 1: small (batch, seq, hidden) shape implied by the module.
    x = jax.random.normal(jax.random.PRNGKey(0), (2, 8, 32), dtype=jnp.float32)
    out = jax.block_until_ready(layer_norm_pallas(x, alpha, bias, eps=eps))
    ref = _reference(x, alpha, bias, eps)
    assert out.shape == x.shape and out.dtype == x.dtype
    assert jnp.allclose(out, ref, atol=1e-4, rtol=1e-4)

    # Test 2: row count not a multiple of the tile (single ragged block),
    # lane-dense hidden size.
    x2 = jax.random.normal(jax.random.PRNGKey(1), (3, 5, 128), dtype=jnp.float32)
    out2 = jax.block_until_ready(layer_norm_pallas(x2, alpha, bias, eps=eps))
    ref2 = _reference(x2, alpha, bias, eps)
    assert out2.shape == x2.shape and out2.dtype == x2.dtype
    assert jnp.allclose(out2, ref2, atol=1e-4, rtol=1e-4)

    # Test 3: multiple grid steps AND a ragged last block (rows=148, block=16),
    # exercising the no-pad clipping path; shifted mean stresses the centered
    # variance computation.
    x3 = 10.0 + jax.random.normal(jax.random.PRNGKey(2), (4, 37, 256),
                                  dtype=jnp.float32)
    out3 = jax.block_until_ready(layer_norm_pallas(x3, alpha, bias, eps=eps))
    ref3 = _reference(x3, alpha, bias, eps)
    assert out3.shape == x3.shape and out3.dtype == x3.dtype
    assert jnp.allclose(out3, ref3, atol=1e-4, rtol=1e-4)

    print("KERNEL_OK")
</pallas_src>

<mosaic_0001>
module attributes {stable_mosaic.version = 11 : i64} {
  func.func @_layernorm_kernel(%arg0: i32, %arg1: memref<1xf32, #tpu.memory_space<smem>>, %arg2: memref<1xf32, #tpu.memory_space<smem>>, %arg3: memref<16x32xf32, #tpu.memory_space<vmem>>, %arg4: memref<16x32xf32, #tpu.memory_space<vmem>>) attributes {dimension_semantics = [#tpu.dimension_semantics<parallel>], iteration_bounds = array<i64: 1>, scalar_prefetch = 2 : i64, scratch_operands = 0 : i64, tpu.core_type = #tpu.core_type<tc>, window_params = [{transform_indices = @transform_0, window_bounds = array<i64: 16, 32>}, {transform_indices = @transform_1, window_bounds = array<i64: 16, 32>}]} {
    %c0 = arith.constant 0 : index
    %c0_0 = arith.constant 0 : index
    %0 = vector.load %arg3[%c0, %c0_0] : memref<16x32xf32, #tpu.memory_space<vmem>>, vector<16x32xf32>
    %cst = arith.constant dense<0.000000e+00> : vector<16xf32>
    %1 = vector.multi_reduction <add>, %0, %cst [1] : vector<16x32xf32> to vector<16xf32>
    %2 = vector.shape_cast %1 : vector<16xf32> to vector<16x1xf32>
    %cst_1 = arith.constant 3.125000e-02 : f32
    %3 = vector.broadcast %cst_1 : f32 to vector<16x1xf32>
    %4 = arith.mulf %2, %3 : vector<16x1xf32>
    %5 = vector.broadcast %4 : vector<16x1xf32> to vector<16x32xf32>
    %6 = arith.subf %0, %5 : vector<16x32xf32>
    %7 = arith.mulf %6, %6 : vector<16x32xf32>
    %cst_2 = arith.constant dense<0.000000e+00> : vector<16xf32>
    %8 = vector.multi_reduction <add>, %7, %cst_2 [1] : vector<16x32xf32> to vector<16xf32>
    %9 = vector.shape_cast %8 : vector<16xf32> to vector<16x1xf32>
    %cst_3 = arith.constant 3.100000e+01 : f32
    %10 = vector.broadcast %cst_3 : f32 to vector<16x1xf32>
    %11 = arith.divf %9, %10 : vector<16x1xf32>
    %12 = math.sqrt %11 : vector<16x1xf32>
    %c0_4 = arith.constant 0 : index
    %13 = memref.load %arg1[%c0_4] : memref<1xf32, #tpu.memory_space<smem>>
    %cst_5 = arith.constant 9.99999997E-7 : f32
    %14 = vector.broadcast %cst_5 : f32 to vector<16x1xf32>
    %15 = arith.addf %12, %14 : vector<16x1xf32>
    %16 = vector.broadcast %13 : f32 to vector<16x1xf32>
    %17 = arith.divf %16, %15 : vector<16x1xf32>
    %18 = vector.broadcast %17 : vector<16x1xf32> to vector<16x32xf32>
    %19 = arith.mulf %6, %18 : vector<16x32xf32>
    %c0_6 = arith.constant 0 : index
    %20 = memref.load %arg2[%c0_6] : memref<1xf32, #tpu.memory_space<smem>>
    %21 = vector.broadcast %20 : f32 to vector<16x32xf32>
    %22 = arith.addf %19, %21 : vector<16x32xf32>
    %c0_7 = arith.constant 0 : index
    %c0_8 = arith.constant 0 : index
    %23 = vector.load %arg4[%c0_7, %c0_8] : memref<16x32xf32, #tpu.memory_space<vmem>>, vector<16x32xf32>
    tpu.vector_store %arg4[%c0_7, %c0_8], %22 {strides = array<i32>} : memref<16x32xf32, #tpu.memory_space<vmem>>, vector<16x32xf32>,
    return
  }
  func.func @transform_0(%arg0: i32, %arg1: memref<1xf32, #tpu.memory_space<smem>>, %arg2: memref<1xf32, #tpu.memory_space<smem>>) -> (i32, i32) {
    %c0_i32 = arith.constant 0 : i32
    %c0_i32_0 = arith.constant 0 : i32
    return %arg0, %c0_i32 : i32, i32
  }
  func.func @transform_1(%arg0: i32, %arg1: memref<1xf32, #tpu.memory_space<smem>>, %arg2: memref<1xf32, #tpu.memory_space<smem>>) -> (i32, i32) {
    %c0_i32 = arith.constant 0 : i32
    %c0_i32_0 = arith.constant 0 : i32
    return %arg0, %c0_i32 : i32, i32
  }
}

</mosaic_0001>

<llo_original>
// kernel: tpu_custom_call.1
$region0: #{tpu_custom_call.1}
  #allocation0 [shape = 'u32[]', space=smem, size = 0x4, offset = 0x4, fixed_abs, tag = 'smem constant byte address 0x4 - core index']
  #allocation1 [shape = 'u32[144,128]{1,0:T(1,128)}', space=vmem, size = 0x12000, scoped, tag = 'internal scratch']
  #allocation2 [shape = 's32[1]{0}', space=sflag, size = 0x4, scoped, tag = 'scoped memory for tpu_custom_call.1']
  #allocation3 [shape = 'f32[1]{0:T(128)S(6)}', space=smem, size = 0x200, scoped, tag = 'prefetched SMEM operand 0']
  #allocation4 [shape = 'f32[1]{0:T(128)S(6)}', space=smem, size = 0x200, scoped, tag = 'prefetched SMEM operand 1']
  %s0 = inlined_call_operand.<no memory space> [shape: f32[1], index: 0, kind: input, shape index: {}]
  %s1 = inlined_call_operand.<no memory space> [shape: f32[1], index: 1, kind: input, shape index: {}]
  %s2 = inlined_call_operand.hbm [shape: f32[16,32], index: 2, kind: input, shape index: {}]
  %s3 = inlined_call_operand.hbm [shape: f32[16,32], index: 3, kind: output, shape index: {}]
  %s4 = sld [smem:[#allocation0]]
  $region18: #{tpu_custom_call.1} parent=0
    _
  %s6 = ssub.s32 1, %s4
  %s7 = scalar_select 0, %s6, %s4
  %8 = sst [smem:[#allocation3]] %s0
  %9 = sst [smem:[#allocation4]] %s1
  $region1: #{tpu_custom_call.1} parent=0
    #allocation5 [shape = 'u8[8192]{0}', space=vmem, size = 0x2000, scoped, tag = 'input window, operand 2, single buffered']
    #allocation6 [shape = 's32[1]{0}', space=sflag, size = 0x4, scoped, tag = 'scoped memory for tpu_custom_call.1']
    #allocation7 [shape = 's32[1]{0}', space=sflag, size = 0x4, scoped, tag = 'scoped memory for tpu_custom_call.1']
    #allocation8 [shape = 'u8[8192]{0}', space=vmem, size = 0x2000, scoped, tag = 'output window, operand 0, single buffered']
    %10 = vsyncpa [#allocation6], 0
    %11 = vsyncpa [#allocation7], 0
    // Predicated region
    $region2: #{tpu_custom_call.1} parent=1 // pred_check
      _
    $region3: #{tpu_custom_call.1} parent=1 // pred_check_branch
      %13 = sbr.rel (0) target = $region5
    $region4: #{tpu_custom_call.1} parent=1 // pred_region
      %s15 = ssub.s32 256, 256
      %16 = vsyncadd [#allocation6], %s15
      %s17 = sshll.u32 [#allocation5], 4
      %s18 = int_to_ptr.vmem [resolvable:$true] %s17
      %23 = dma.hbm_to_vmem [thread:$0]  %s2, 256, %s18, [#allocation6], 128, 128, 8
    $region5: #{tpu_custom_call.1} parent=1 // pred_fallthru
      _
    // Predicated region
    $region6: #{tpu_custom_call.1} parent=1 // pred_check
      _
    $region7: #{tpu_custom_call.1} parent=1 // pred_check_branch
      %25 = sbr.rel (0) target = $region9
    $region8: #{tpu_custom_call.1} parent=1 // pred_region
      %26 = dma.done [#allocation6], 256
    $region9: #{tpu_custom_call.1} parent=1 // pred_fallthru
      _
    %v27 = vld [vmem:[#allocation5] sm:$0xff]
    %v28 = vld [vmem:[#allocation5 + $0x8] sm:$0xff]
    %vm29 = vcmask 261120
    %v30 = vsel %vm29, %v27, 0.0
    %31 = vadd.xlane.f32.xlu0 %v30
    %v32 = vpop.xlane.xlu0 %31
    %v33 = vsel %vm29, %v28, 0.0
    %34 = vadd.xlane.f32.xlu0 %v33
    %v35 = vpop.xlane.xlu0 %34
    %v36 = vmul.f32 %v32, 0.03125
    %v37 = vmul.f32 %v35, 0.03125
    %v38 = vsub.f32 %v27, %v36
    %v39 = vsub.f32 %v28, %v37
    %v40 = vmul.f32 %v38, %v38
    %v41 = vmul.f32 %v39, %v39
    %v42 = vsel %vm29, %v40, 0.0
    %43 = vadd.xlane.f32.xlu0 %v42
    %v44 = vpop.xlane.xlu0 %43
    %v45 = vsel %vm29, %v41, 0.0
    %46 = vadd.xlane.f32.xlu0 %v45
    %v47 = vpop.xlane.xlu0 %46
    %v48 = vrcp.pop 31.0
    %v49 = vmul.f32 %v44, %v48
    %v50 = vmul.f32 %v47, %v48
    %v51 = vrsqrt.pop %v49
    %v52 = vmul.f32 %v49, %v51
    %vm53 = vcmp.eq.f32.partialorder %v49, inf
    %v54 = vsel %vm53, %v49, %v52
    %vm55 = vcmp.eq.f32.partialorder %v49, 0.0
    %v56 = vand.u32 %v49, 2147483648
    %v57 = vsel %vm55, %v56, %v54
    %v58 = vrsqrt.pop %v50
    %v59 = vmul.f32 %v50, %v58
    %vm60 = vcmp.eq.f32.partialorder %v50, inf
    %v61 = vsel %vm60, %v50, %v59
    %vm62 = vcmp.eq.f32.partialorder %v50, 0.0
    %v63 = vand.u32 %v50, 2147483648
    %v64 = vsel %vm62, %v63, %v61
    %s65 = sld [smem:[#allocation3]]
    %v66 = vadd.f32 %v57, 1e-06
    %v67 = vadd.f32 %v64, 1e-06
    %v68 = vstv %s65
    %v69 = vrcp.pop %v66
    %v70 = vmul.f32 %v68, %v69
    %v71 = vrcp.pop %v67
    %v72 = vmul.f32 %v68, %v71
    %v73 = vmul.f32 %v38, %v70
    %v74 = vmul.f32 %v39, %v72
    %s75 = sld [smem:[#allocation4]]
    %v76 = vstv %s75
    %v77 = vadd.f32 %v73, %v76
    %v78 = vadd.f32 %v74, %v76
    %79 = vst.msk [vmem:[#allocation8] sm:$0xff] %vm29, %v77
    %80 = vst.msk [vmem:[#allocation8 + $0x8] sm:$0xff] %vm29, %v78
    // Predicated region
    $region10: #{tpu_custom_call.1} parent=1 // pred_check
      _
    $region11: #{tpu_custom_call.1} parent=1 // pred_check_branch
      %82 = sbr.rel (0) target = $region13
    $region12: #{tpu_custom_call.1} parent=1 // pred_region
      %s84 = ssub.s32 256, 256
      %85 = vsyncadd [#allocation7], %s84
      %s86 = sshll.u32 [#allocation8], 4
      %s87 = int_to_ptr.vmem [resolvable:$true] %s86
      %92 = dma.vmem_to_hbm [thread:$0]  %s87, 256, %s3, [#allocation7], 128, 128, 8
    $region13: #{tpu_custom_call.1} parent=1 // pred_fallthru
      _
    // Predicated region
    $region14: #{tpu_custom_call.1} parent=1 // pred_check
      _
    $region15: #{tpu_custom_call.1} parent=1 // pred_check_branch
      %94 = sbr.rel (0) target = $region17
    $region16: #{tpu_custom_call.1} parent=1 // pred_region
      %95 = dma.done [#allocation7], 256
    $region17: #{tpu_custom_call.1} parent=1 // pred_fallthru
      _
    %96 = vsyncpa [#allocation6], 1
    %97 = vsyncpa [#allocation7], 1

</llo_original>
